<compile_context>
chip_gen: v5e
topology: v5e:2x2
jax: 0.10.0
libtpu: 0.0.40
codegen_flags: <defaults>
</compile_context>

<pallas_src>
import math

import jax
import jax.numpy as jnp
from jax.experimental import pallas as pl
from jax.experimental.pallas import tpu as pltpu

_EPS = 1e-5
_VMEM_LIMIT = 32 * 1024 * 1024


def _round_up(x, m):
    return (x + m - 1) // m * m


# ------------------------------ Pallas kernels ------------------------------ #

def _conv_stats_kernel(x_ref, w_ref, stats_ref):
    """Pass 1: conv tile on the MXU + per-channel sum / sum-of-squares.

    x:(TM,K) bf16   w:(K,CP) bf16   stats:(1,8,CP) f32  (row0 = sum, row1 = sumsq)
    """
    y = jnp.dot(x_ref[...], w_ref[...], preferred_element_type=jnp.float32)
    s = jnp.sum(y, axis=0, keepdims=True)           # (1, CP) sublane reduce (XLU)
    ss = jnp.sum(y * y, axis=0, keepdims=True)      # (1, CP)
    pad = jnp.zeros((6, y.shape[1]), jnp.float32)
    stats_ref[...] = jnp.concatenate([s, ss, pad], axis=0)[None]


def _conv_norm_relu_kernel(x_ref, w_ref, scale_ref, shift_ref, o_ref):
    """Pass 2: recompute conv tile, apply folded BN (y*scale + shift) + ReLU."""
    y = jnp.dot(x_ref[...], w_ref[...], preferred_element_type=jnp.float32)
    y = y * scale_ref[...] + shift_ref[...]
    o_ref[...] = jnp.maximum(y, 0.0).astype(o_ref.dtype)


# ------------------------------ host-side plumbing -------------------------- #

def _im2col_3x3_pad1(x_nhwc):
    """x: (N,H,W,C) -> (N*H*W, 9*C), patch ordering (dy, dx, c)."""
    N, H, W, C = x_nhwc.shape
    xp = jnp.pad(x_nhwc, ((0, 0), (1, 1), (1, 1), (0, 0)))
    patches = [xp[:, dy:dy + H, dx:dx + W, :] for dy in range(3) for dx in range(3)]
    return jnp.concatenate(patches, axis=-1).reshape(N * H * W, 9 * C)


def _pick_tile_m(M, K, CP):
    """Per-generation VMEM-aware M-tile (double-buffered bf16 x-tile + f32 out-tile)."""
    try:
        kind = jax.devices()[0].device_kind.lower()
    except Exception:
        kind = ""
    is_v7 = "v7" in kind
    budget = (20 if is_v7 else 24) * 1024 * 1024       # headroom under _VMEM_LIMIT
    per_row = 2 * (K * 2 + CP * 4)                     # dbl-buffered x row + out row
    fixed = 2 * K * CP * 2 + (1 << 20)                 # weights + slack
    cap = max(256, ((budget - fixed) // per_row) // 8 * 8)
    tm = min(1024 if is_v7 else 2048, cap)
    if M >= 512:                                       # >=2 tiles: pipelining + megacore
        tm = min(tm, _round_up(pl.cdiv(M, 2), 8))
    return min(tm, _round_up(M, 8))


def _conv_bn_relu_layer(x_nhwc, w_oihw, gamma, beta, out_dtype=jnp.float32):
    """Conv2d(3x3, pad=1, bias cancelled) + BatchNorm2d(train) + ReLU via two Pallas passes."""
    N, H, W, Cin = x_nhwc.shape
    Cout = w_oihw.shape[0]
    M, K = N * H * W, 9 * Cin
    CP = _round_up(Cout, 128)          # lane-dense output channels

    # TODO(synk): im2col is still materialized wrapper-side (XLA); moving it in-kernel
    # (halo-tile DMA + 9 shifted accumulating dots) would cut activation HBM traffic ~9x.
    x_col = _im2col_3x3_pad1(x_nhwc.astype(jnp.bfloat16))            # (M, K) bf16

    TM = _pick_tile_m(M, K, CP)
    MP = _round_up(M, TM)
    num_tiles = MP // TM
    if MP > M:   # zero rows: contribute nothing to sums (bias dropped), sliced off below
        x_col = jnp.pad(x_col, ((0, MP - M), (0, 0)))

    # (Cout,Cin,3,3) -> (3,3,Cin,Cout) -> (9*Cin, Cout), matching (dy,dx,c); pad Cout->CP.
    w_col = jnp.transpose(w_oihw, (2, 3, 1, 0)).reshape(K, Cout)
    w_col = jnp.pad(w_col, ((0, 0), (0, CP - Cout))).astype(jnp.bfloat16)
    g = jnp.pad(gamma.astype(jnp.float32), (0, CP - Cout))            # pad gamma/beta with 0
    b = jnp.pad(beta.astype(jnp.float32), (0, CP - Cout))             # -> padded channels = 0

    mm_flops = 2 * MP * K * CP
    x_bytes = MP * K * 2
    w_bytes = K * CP * 2

    # ---- Pass 1: per-tile channel sum / sum-of-squares of the conv output ---- #
    stats = pl.pallas_call(
        _conv_stats_kernel,
        out_shape=jax.ShapeDtypeStruct((num_tiles, 8, CP), jnp.float32),
        grid=(num_tiles,),
        in_specs=[
            pl.BlockSpec((TM, K), lambda i: (i, 0)),
            pl.BlockSpec((K, CP), lambda i: (0, 0)),
        ],
        out_specs=pl.BlockSpec((1, 8, CP), lambda i: (i, 0, 0)),
        compiler_params=pltpu.CompilerParams(
            dimension_semantics=("parallel",),
            vmem_limit_bytes=_VMEM_LIMIT),
        cost_estimate=pl.CostEstimate(
            flops=mm_flops, transcendentals=0,
            bytes_accessed=x_bytes + w_bytes + num_tiles * 8 * CP * 4),
    )(x_col, w_col)

    # ---- Finalize BN in plain JAX (per-channel, tiny): biased var, eps=1e-5. ---- #
    # Conv bias cancels under train-mode BN, so it never appears.  Fold into scale/shift.
    s = jnp.sum(stats[:, 0, :], axis=0)
    ss = jnp.sum(stats[:, 1, :], axis=0)
    mean = s / M
    var = jnp.maximum(ss / M - mean * mean, 0.0)
    scale = g * jax.lax.rsqrt(var + _EPS)
    shift = b - mean * scale

    # ---- Pass 2: recompute conv tile, one FMA + ReLU, lane-dense stores. ---- #
    out = pl.pallas_call(
        _conv_norm_relu_kernel,
        out_shape=jax.ShapeDtypeStruct((MP, CP), out_dtype),
        grid=(num_tiles,),
        in_specs=[
            pl.BlockSpec((TM, K), lambda i: (i, 0)),
            pl.BlockSpec((K, CP), lambda i: (0, 0)),
            pl.BlockSpec((1, CP), lambda i: (0, 0)),
            pl.BlockSpec((1, CP), lambda i: (0, 0)),
        ],
        out_specs=pl.BlockSpec((TM, CP), lambda i: (i, 0)),
        compiler_params=pltpu.CompilerParams(
            dimension_semantics=("parallel",),
            vmem_limit_bytes=_VMEM_LIMIT),
        cost_estimate=pl.CostEstimate(
            flops=mm_flops + 3 * MP * CP, transcendentals=0,
            bytes_accessed=x_bytes + w_bytes + MP * CP * jnp.dtype(out_dtype).itemsize),
    )(x_col, w_col, scale.reshape(1, CP), shift.reshape(1, CP))

    return out[:M, :Cout].reshape(N, H, W, Cout)


def init_conv_block_params(key, in_channels, out_channels):
    k1, k2, k3, k4 = jax.random.split(key, 4)
    fan1, fan2 = in_channels * 9, out_channels * 9
    bound1, bound2 = 1.0 / math.sqrt(fan1), 1.0 / math.sqrt(fan2)
    return {
        "w1": jax.random.uniform(k1, (out_channels, in_channels, 3, 3),
                                 jnp.float32, -bound1, bound1),
        "b1": jax.random.uniform(k2, (out_channels,), jnp.float32, -bound1, bound1),
        "g1": jnp.ones((out_channels,), jnp.float32),    # BatchNorm gamma
        "be1": jnp.zeros((out_channels,), jnp.float32),  # BatchNorm beta
        "w2": jax.random.uniform(k3, (out_channels, out_channels, 3, 3),
                                 jnp.float32, -bound2, bound2),
        "b2": jax.random.uniform(k4, (out_channels,), jnp.float32, -bound2, bound2),
        "g2": jnp.ones((out_channels,), jnp.float32),
        "be2": jnp.zeros((out_channels,), jnp.float32),
    }


def conv_block_forward(x_nchw, params):
    """Matches ConvBlock.forward on NCHW input.  The conv biases (b1/b2) are
    mathematically cancelled by the train-mode BatchNorm mean subtraction, so they
    are intentionally not applied (result is identical)."""
    x = jnp.transpose(x_nchw, (0, 2, 3, 1))                           # NCHW -> NHWC
    y = _conv_bn_relu_layer(x, params["w1"], params["g1"], params["be1"],
                            out_dtype=jnp.bfloat16)  # bf16 intermediate feeds layer-2 MXU
    y = _conv_bn_relu_layer(y, params["w2"], params["g2"], params["be2"],
                            out_dtype=jnp.float32)
    return jnp.transpose(y, (0, 3, 1, 2))                             # NHWC -> NCHW


def _reference_forward(x_nchw, params):
    """Pure-JAX f32 reference with the literal PyTorch semantics (incl. conv bias)."""
    def layer(x, w, b, g, be):
        y = jax.lax.conv_general_dilated(
            x, jnp.transpose(w, (2, 3, 1, 0)), window_strides=(1, 1),
            padding="SAME", dimension_numbers=("NHWC", "HWIO", "NHWC"))
        y = y + b
        mean = jnp.mean(y, axis=(0, 1, 2))
        var = jnp.mean(jnp.square(y - mean), axis=(0, 1, 2))
        y = (y - mean) * jax.lax.rsqrt(var + _EPS) * g + be
        return jnp.maximum(y, 0.0)
    x = jnp.transpose(x_nchw, (0, 2, 3, 1))
    y = layer(x, params["w1"], params["b1"], params["g1"], params["be1"])
    y = layer(y, params["w2"], params["b2"], params["g2"], params["be2"])
    return jnp.transpose(y, (0, 3, 1, 2))


if __name__ == "__main__":
    key = jax.random.PRNGKey(0)
    k_x, k_p = jax.random.split(key)

    N, Cin, Cout, H, W = 2, 4, 8, 16, 16
    x = jax.random.normal(k_x, (N, Cin, H, W), dtype=jnp.float32)
    params = init_conv_block_params(k_p, Cin, Cout)

    out = jax.block_until_ready(conv_block_forward(x, params))
    assert out.shape == (N, Cout, H, W)

    ref = jax.block_until_ready(_reference_forward(x, params))
    max_err = float(jnp.max(jnp.abs(out - ref)))
    assert max_err < 1e-1, f"mismatch vs reference: {max_err}"
    print("KERNEL_OK")
</pallas_src>

<mosaic_0001>
module attributes {stable_mosaic.version = 11 : i64} {
  func.func @_conv_stats_kernel(%arg0: i32, %arg1: memref<256x36xbf16, #tpu.memory_space<vmem>>, %arg2: memref<36x128xbf16, #tpu.memory_space<vmem>>, %arg3: memref<1x8x128xf32, #tpu.memory_space<vmem>>) attributes {dimension_semantics = [#tpu.dimension_semantics<parallel>], iteration_bounds = array<i64: 2>, scalar_prefetch = 0 : i64, scratch_operands = 0 : i64, tpu.core_type = #tpu.core_type<tc>, window_params = [{transform_indices = @transform_0, window_bounds = array<i64: 256, 36>}, {pipeline_mode = #tpu.pipeline_mode<synchronous>, transform_indices = @transform_1, window_bounds = array<i64: 36, 128>}, {transform_indices = @transform_2, window_bounds = array<i64: 1, 8, 128>}]} {
    %c0 = arith.constant 0 : index
    %c0_0 = arith.constant 0 : index
    %0 = vector.load %arg1[%c0, %c0_0] : memref<256x36xbf16, #tpu.memory_space<vmem>>, vector<256x36xbf16>
    %c0_1 = arith.constant 0 : index
    %c0_2 = arith.constant 0 : index
    %1 = vector.load %arg2[%c0_1, %c0_2] : memref<36x128xbf16, #tpu.memory_space<vmem>>, vector<36x128xbf16>
    %cst = arith.constant dense<0.000000e+00> : vector<256x128xf32>
    %2 = tpu.matmul %0, %1, %cst {dimension_numbers = #tpu.dot_dimension_numbers<[1], [0], [0], [1], [0, 0, 1, 1], [], []>} : vector<256x36xbf16>, vector<36x128xbf16>, vector<256x128xf32> -> vector<256x128xf32>
    %cst_3 = arith.constant dense<0.000000e+00> : vector<128xf32>
    %3 = vector.multi_reduction <add>, %2, %cst_3 [0] : vector<256x128xf32> to vector<128xf32>
    %4 = vector.shape_cast %3 : vector<128xf32> to vector<1x128xf32>
    %5 = arith.mulf %2, %2 : vector<256x128xf32>
    %cst_4 = arith.constant dense<0.000000e+00> : vector<128xf32>
    %6 = vector.multi_reduction <add>, %5, %cst_4 [0] : vector<256x128xf32> to vector<128xf32>
    %7 = vector.shape_cast %6 : vector<128xf32> to vector<1x128xf32>
    %cst_5 = arith.constant 0.000000e+00 : f32
    %8 = vector.broadcast %cst_5 : f32 to vector<6x128xf32>
    %9 = tpu.concatenate %4, %7, %8 in 0 : vector<1x128xf32>, vector<1x128xf32>, vector<6x128xf32> -> vector<8x128xf32>
    %10 = vector.shape_cast %9 : vector<8x128xf32> to vector<1x8x128xf32>
    %c0_6 = arith.constant 0 : index
    %c0_7 = arith.constant 0 : index
    %c0_8 = arith.constant 0 : index
    %11 = vector.load %arg3[%c0_6, %c0_7, %c0_8] : memref<1x8x128xf32, #tpu.memory_space<vmem>>, vector<1x8x128xf32>
    tpu.vector_store %arg3[%c0_6, %c0_7, %c0_8], %10 {strides = array<i32>} : memref<1x8x128xf32, #tpu.memory_space<vmem>>, vector<1x8x128xf32>,
    return
  }
  func.func @transform_0(%arg0: i32) -> (i32, i32) {
    %c0_i32 = arith.constant 0 : i32
    %c0_i32_0 = arith.constant 0 : i32
    return %arg0, %c0_i32 : i32, i32
  }
  func.func @transform_1(%arg0: i32) -> (i32, i32) {
    %c0_i32 = arith.constant 0 : i32
    %c0_i32_0 = arith.constant 0 : i32
    %c0_i32_1 = arith.constant 0 : i32
    return %c0_i32, %c0_i32_0 : i32, i32
  }
  func.func @transform_2(%arg0: i32) -> (i32, i32, i32) {
    %c0_i32 = arith.constant 0 : i32
    %c0_i32_0 = arith.constant 0 : i32
    %c0_i32_1 = arith.constant 0 : i32
    return %arg0, %c0_i32, %c0_i32_0 : i32, i32, i32
  }
}

</mosaic_0001>

<llo_original>
// kernel: tpu_custom_call.1
$region0: #{tpu_custom_call.1}
  #allocation0 [shape = 'u32[]', space=smem, size = 0x4, offset = 0x4, fixed_abs, tag = 'smem constant byte address 0x4 - core index']
  #allocation1 [shape = 'u32[72,128]{1,0:T(1,128)}', space=vmem, size = 0x9000, scoped, tag = 'internal scratch']
  %s0 = inlined_call_operand.vmem [shape: bf16[512,36], index: 0, kind: input, shape index: {}]
  %s1 = inlined_call_operand.vmem [shape: bf16[36,128], index: 1, kind: input, shape index: {}]
  %s2 = inlined_call_operand.hbm [shape: f32[2,8,128], index: 2, kind: output, shape index: {}]
  %s3 = sld [smem:[#allocation0]]
  $region41: #{tpu_custom_call.1} parent=0
    _
  %s5 = ssub.s32 1, %s3
  %s6 = scalar_select 0, %s5, %s3
  $region1: #{tpu_custom_call.1} parent=0
    #allocation2 [shape = 'u8[8192]{0}', space=vmem, size = 0x2000, scoped, tag = 'output window, operand 0']
    #allocation3 [shape = 's32[2]{0}', space=sflag, size = 0x8, scoped, tag = 'scoped memory for tpu_custom_call.1']
    %7 = vsyncpa [#allocation3], 0
    %s8 = scalar_lea.sflag [#allocation3], 1
    %9 = vsyncpa %s8, 0
    loop: start=0, step=1, limit=4
    $region2: #{tpu_custom_call.1} parent=1 // loop_pre_header
      _
    $region3: #{tpu_custom_call.1} parent=1 // loop_header
      %s11 = sphi 0, %s15
      %p12 = scmp.ge.s32.totalorder %s11, 4
      %s21 = sphi 0, %s23
      %s24 = sphi 0, %s21
      %s25 = sphi 0, %s24
      %s41 = sphi 0, %s25
      %s45 = sphi 0, %s45
      %s47 = sphi 0, %s45
      %s48 = sphi 0, %s47
      %s62 = sphi 0, %s48
      %s68 = sphi 0, %s70
      %s71 = sphi 0, %s68
      %s72 = sphi 0, %s71
      %s88 = sphi 0, %s72
    $region4: #{tpu_custom_call.1} parent=1 // loop_header_branch
      %14 = sbr.rel (%p12) target = $region8
    $region5: #{tpu_custom_call.1} parent=1 // loop_body
      %s16 = ssub.s32 %s11, 1
      %s17 = ssub.s32 %s11, 2
      %s18 = sadd.s32 %s11, 1
      %s19 = ssub.s32 %s11, %s18
      %p20 = scmp.eq.s32.totalorder %s19, 0
      %s22 = sadd.s32 %s21, 1
      %s23 = scalar_select %p20, %s21, %s22
      %p26 = pneg %p20
      %p27 = scmp.eq.s32.totalorder %s11, 1
      %p28 = por %p26, %p27
      %p29 = scmp.ne.s32.totalorder %s21, %s24
      %p30 = scmp.eq.s32.totalorder %s11, 0
      %p31 = por %p29, %p30
      %p32 = scmp.ne.s32.totalorder %s21, %s24
      %p33 = scmp.eq.s32.totalorder %s16, 1
      %p34 = por %p32, %p33
      %p35 = scmp.ne.s32.totalorder %s24, %s25
      %p36 = scmp.eq.s32.totalorder %s16, 0
      %p37 = por %p35, %p36
      %p38 = scmp.ne.s32.totalorder %s24, %s25
      %p39 = scmp.eq.s32.totalorder %s17, 1
      %p40 = por %p38, %p39
      %p42 = scmp.ne.s32.totalorder %s25, %s41
      %p43 = scmp.eq.s32.totalorder %s17, 0
      %p44 = por %p42, %p43
      %s46 = sadd.s32 %s45, 1
      %p49 = scmp.eq.s32.totalorder %s11, 1
      %p50 = scmp.ne.s32.totalorder %s45, %s47
      %p51 = scmp.eq.s32.totalorder %s11, 0
      %p52 = por %p50, %p51
      %p53 = scmp.ne.s32.totalorder %s45, %s47
      %p54 = scmp.eq.s32.totalorder %s16, 1
      %p55 = por %p53, %p54
      %p56 = scmp.ne.s32.totalorder %s47, %s48
      %p57 = scmp.eq.s32.totalorder %s16, 0
      %p58 = por %p56, %p57
      %p59 = scmp.ne.s32.totalorder %s47, %s48
      %p60 = scmp.eq.s32.totalorder %s17, 1
      %p61 = por %p59, %p60
      %p63 = scmp.ne.s32.totalorder %s48, %s62
      %p64 = scmp.eq.s32.totalorder %s17, 0
      %p65 = por %p63, %p64
      %s66 = ssub.s32 %s11, %s18
      %p67 = scmp.eq.s32.totalorder %s66, 0
      %s69 = sadd.s32 %s68, 1
      %s70 = scalar_select %p67, %s68, %s69
      %p73 = pneg %p67
      %p74 = scmp.eq.s32.totalorder %s11, 1
      %p75 = por %p73, %p74
      %p76 = scmp.ne.s32.totalorder %s68, %s71
      %p77 = scmp.eq.s32.totalorder %s11, 0
      %p78 = por %p76, %p77
      %p79 = scmp.ne.s32.totalorder %s68, %s71
      %p80 = scmp.eq.s32.totalorder %s16, 1
      %p81 = por %p79, %p80
      %p82 = scmp.ne.s32.totalorder %s71, %s72
      %p83 = scmp.eq.s32.totalorder %s16, 0
      %p84 = por %p82, %p83
      %p85 = scmp.ne.s32.totalorder %s71, %s72
      %p86 = scmp.eq.s32.totalorder %s17, 1
      %p87 = por %p85, %p86
      %p89 = scmp.ne.s32.totalorder %s72, %s88
      %p90 = scmp.eq.s32.totalorder %s17, 0
      %p91 = por %p89, %p90
      %p92 = scmp.le.s32.totalorder 1, %s11
      %p93 = scmp.lt.s32.totalorder %s11, 3
      %p94 = pnand %p92, %p93
      %p95 = pneg %p94
      // Predicated region
      $region9: #{tpu_custom_call.1} parent=5 // pred_check
        _
      $region10: #{tpu_custom_call.1} parent=5 // pred_check_branch
        %97 = sbr.rel (%p94) target = $region12
      $region11: #{tpu_custom_call.1} parent=5 // pred_region
        %s98 = ssub.s32 %s11, 1
        // Predicated region
        $region13: #{tpu_custom_call.1} parent=11 // pred_check
          %p99 = pneg %p58
        $region14: #{tpu_custom_call.1} parent=11 // pred_check_branch
          %101 = sbr.rel (%p99) target = $region16
        $region15: #{tpu_custom_call.1} parent=11 // pred_region
          _
        $region16: #{tpu_custom_call.1} parent=11 // pred_fallthru
          _
      $region12: #{tpu_custom_call.1} parent=5 // pred_fallthru
        _
      %p102 = scmp.lt.s32.totalorder %s11, 2
      // Predicated region
      $region17: #{tpu_custom_call.1} parent=5 // pred_check
        %p103 = pneg %p102
      $region18: #{tpu_custom_call.1} parent=5 // pred_check_branch
        %105 = sbr.rel (%p103) target = $region20
      $region19: #{tpu_custom_call.1} parent=5 // pred_region
        // Predicated region
        $region21: #{tpu_custom_call.1} parent=19 // pred_check
          %p106 = pneg %p31
        $region22: #{tpu_custom_call.1} parent=19 // pred_check_branch
          %108 = sbr.rel (%p106) target = $region24
        $region23: #{tpu_custom_call.1} parent=19 // pred_region
          %s109 = smul.u32 32, %s11
          %p110 = scmp.lt.s32.totalorder %s109, 63
          %s111 = scalar_select %p110, %s109, 63
          %s112 = smul.addr %s111, 4
          %s113 = scalar_lea.vmem %s0, %s112
          %s114 = smul.u32 32, %s11
        $region24: #{tpu_custom_call.1} parent=19 // pred_fallthru
          _
      $region20: #{tpu_custom_call.1} parent=5 // pred_fallthru
        _
      %p115 = scmp.le.s32.totalorder 1, %s11
      %p116 = scmp.lt.s32.totalorder %s11, 3
      %p117 = pnand %p115, %p116
      %p118 = pneg %p117
      // Predicated region
      $region25: #{tpu_custom_call.1} parent=5 // pred_check
        _
      $region26: #{tpu_custom_call.1} parent=5 // pred_check_branch
        %120 = sbr.rel (%p117) target = $region28
      $region27: #{tpu_custom_call.1} parent=5 // pred_region
        %s121 = ssub.s32 %s11, 1
        %s122 = smul.u32 32, %s16
        %p123 = scmp.lt.s32.totalorder %s122, 63
        %s124 = scalar_select %p123, %s122, 63
        %s125 = smul.addr %s124, 4
        %s126 = scalar_lea.vmem %s0, %s125
        %p127 = pneg %p37
        %p128 = pneg %p34
        %p129 = pneg %p58
        %p130 = pneg %p55
        %p131 = pneg %p84
        %p132 = pneg %p81
        %s133 = sand.u32 %s71, 1
        %s134 = scalar_lea.sflag [#allocation3], %s133
        %s135 = sand.u32 %s71, 1
        %s136 = smul.addr %s135, 8
        %s137 = scalar_lea.vmem [#allocation2], %s136
        %s138 = smul.u32 32, %s16
        %p139 = scmp.lt.s32.totalorder %s138, 63
        %s140 = scalar_select %p139, %s138, 63
        %s141 = smul.addr %s140, 4
        %s142 = scalar_lea.vmem %s0, %s141
        %s143 = smul.u32 32, %s16
        %v145 = vld [vmem:[%s142] sm:$0xf]
        %v146 = vld [vmem:[%s142 + $0x4] sm:$0xf]
        %v147 = vld [vmem:[%s142 + $0x8] sm:$0xf]
        %v148 = vld [vmem:[%s142 + $0xc] sm:$0xf]
        %v149 = vld [vmem:[%s142 + $0x10] sm:$0xf]
        %v150 = vld [vmem:[%s142 + $0x14] sm:$0xf]
        %v151 = vld [vmem:[%s142 + $0x18] sm:$0xf]
        %v152 = vld [vmem:[%s142 + $0x1c] sm:$0xf]
        %v153 = vld [vmem:[%s142 + $0x20] sm:$0xf]
        %v154 = vld [vmem:[%s142 + $0x24] sm:$0xf]
        %v155 = vld [vmem:[%s142 + $0x28] sm:$0xf]
        %v156 = vld [vmem:[%s142 + $0x2c] sm:$0xf]
        %v157 = vld [vmem:[%s142 + $0x30] sm:$0xf]
        %v158 = vld [vmem:[%s142 + $0x34] sm:$0xf]
        %v159 = vld [vmem:[%s142 + $0x38] sm:$0xf]
        %v160 = vld [vmem:[%s142 + $0x3c] sm:$0xf]
        %v161 = vld [vmem:[%s142 + $0x40] sm:$0xf]
        %v162 = vld [vmem:[%s142 + $0x44] sm:$0xf]
        %v163 = vld [vmem:[%s142 + $0x48] sm:$0xf]
        %v164 = vld [vmem:[%s142 + $0x4c] sm:$0xf]
        %v165 = vld [vmem:[%s142 + $0x50] sm:$0xf]
        %v166 = vld [vmem:[%s142 + $0x54] sm:$0xf]
        %v167 = vld [vmem:[%s142 + $0x58] sm:$0xf]
        %v168 = vld [vmem:[%s142 + $0x5c] sm:$0xf]
        %v169 = vld [vmem:[%s142 + $0x60] sm:$0xf]
        %v170 = vld [vmem:[%s142 + $0x64] sm:$0xf]
        %v171 = vld [vmem:[%s142 + $0x68] sm:$0xf]
        %v172 = vld [vmem:[%s142 + $0x6c] sm:$0xf]
        %v173 = vld [vmem:[%s142 + $0x70] sm:$0xf]
        %v174 = vld [vmem:[%s142 + $0x74] sm:$0xf]
        %v175 = vld [vmem:[%s142 + $0x78] sm:$0xf]
        %v176 = vld [vmem:[%s142 + $0x7c] sm:$0xf]
        %v177 = vld [vmem:[%s1] sm:$0xf]
        %v178 = vld [vmem:[%s1 + $0x4] sm:$0xf]
        %v179 = vld [vmem:[%s1 + $0x8] sm:$0xf]
        %v180 = vld [vmem:[%s1 + $0xc] sm:$0xf]
        %v181 = vld [vmem:[%s1 + $0x10] sm:$0x3]
        %v214 = vunpack.c.l.b16 %v145
        %v215 = vunpack.c.l.b16 %v146
        %v216 = vunpack.c.l.b16 %v147
        %v217 = vunpack.c.l.b16 %v148
        %v218 = vunpack.c.l.b16 %v149
        %v219 = vunpack.c.l.b16 %v150
        %v220 = vunpack.c.l.b16 %v151
        %v221 = vunpack.c.l.b16 %v152
        %v222 = vunpack.c.l.b16 %v153
        %v223 = vunpack.c.l.b16 %v154
        %v224 = vunpack.c.l.b16 %v155
        %v225 = vunpack.c.l.b16 %v156
        %v226 = vunpack.c.l.b16 %v157
        %v227 = vunpack.c.l.b16 %v158
        %v228 = vunpack.c.l.b16 %v159
        %v229 = vunpack.c.l.b16 %v160
        %v230 = vunpack.c.l.b16 %v161
        %v231 = vunpack.c.l.b16 %v162
        %v232 = vunpack.c.l.b16 %v163
        %v233 = vunpack.c.l.b16 %v164
        %v234 = vunpack.c.l.b16 %v165
        %v235 = vunpack.c.l.b16 %v166
        %v236 = vunpack.c.l.b16 %v167
        %v237 = vunpack.c.l.b16 %v168
        %v238 = vunpack.c.l.b16 %v169
        %v239 = vunpack.c.l.b16 %v170
        %v240 = vunpack.c.l.b16 %v171
        %v241 = vunpack.c.l.b16 %v172
        %v242 = vunpack.c.l.b16 %v173
        %v243 = vunpack.c.l.b16 %v174
        %v244 = vunpack.c.l.b16 %v175
        %v245 = vunpack.c.l.b16 %v176
        %v246 = vpack.c.b16 %v215, %v214
        %v247 = vpack.c.b16 %v217, %v216
        %v248 = vpack.c.b16 %v219, %v218
        %v249 = vpack.c.b16 %v221, %v220
        %v250 = vpack.c.b16 %v223, %v222
        %v251 = vpack.c.b16 %v225, %v224
        %v252 = vpack.c.b16 %v227, %v226
        %v253 = vpack.c.b16 %v229, %v228
        %v254 = vpack.c.b16 %v231, %v230
        %v255 = vpack.c.b16 %v233, %v232
        %v256 = vpack.c.b16 %v235, %v234
        %v257 = vpack.c.b16 %v237, %v236
        %v258 = vpack.c.b16 %v239, %v238
        %v259 = vpack.c.b16 %v241, %v240
        %v260 = vpack.c.b16 %v243, %v242
        %v261 = vpack.c.b16 %v245, %v244
        %v267 = vunpack.c.l.b16 %v177
        %v268 = vunpack.c.l.b16 %v178
        %v269 = vunpack.c.l.b16 %v179
        %v270 = vunpack.c.l.b16 %v180
        %v271 = vunpack.c.l.b16 %v181
        %v272 = vpack.c.b16 %v268, %v267
        %v273 = vpack.c.b16 %v270, %v269
        %v274 = vpack.c.b16 %v271, %v271
        %vm277 = vcmask 293888
        %v279 = vsel %vm277, %v246, 0
        %v282 = vsel %vm277, %v247, 0
        %v285 = vsel %vm277, %v248, 0
        %v288 = vsel %vm277, %v249, 0
        %v291 = vsel %vm277, %v250, 0
        %v294 = vsel %vm277, %v251, 0
        %v297 = vsel %vm277, %v252, 0
        %v300 = vsel %vm277, %v253, 0
        %v303 = vsel %vm277, %v254, 0
        %v306 = vsel %vm277, %v255, 0
        %v309 = vsel %vm277, %v256, 0
        %v312 = vsel %vm277, %v257, 0
        %v315 = vsel %vm277, %v258, 0
        %v318 = vsel %vm277, %v259, 0
        %v321 = vsel %vm277, %v260, 0
        %v324 = vsel %vm277, %v261, 0
        %vm326 = vcmask 1041408
        %v328 = vsel %vm326, %v274, 0
        %330 = vmatpush.bf16.msra.mxu0 0
        %331 = vmatpush.bf16.msra.mxu0 0
        %332 = vmatpush.bf16.msra.mxu0 0
        %333 = vmatpush.bf16.msra.mxu0 0
        %334 = vmatpush.bf16.msra.mxu0 0
        %335 = vmatpush.bf16.msra.mxu0 %v328
        %336 = vmatpush.bf16.msra.mxu0 %v273
        %337 = vmatpush.bf16.msra.mxu0 %v272
        %338 = vmatmul.bf16.gmra.mxu0 %v279
        %v339 = vpop.f32.mrf.mxu0
        %v340 = vadd.f32 0.0, %v339
        %v341 = vpop.f32.mrf.mxu0
        %v342 = vadd.f32 0.0, %v341
        %343 = vmatmul.bf16.gmra.mxu0 %v282
        %v344 = vpop.f32.mrf.mxu0
        %v345 = vadd.f32 0.0, %v344
        %v346 = vpop.f32.mrf.mxu0
        %v347 = vadd.f32 0.0, %v346
        %348 = vmatmul.bf16.gmra.mxu0 %v285
        %v349 = vpop.f32.mrf.mxu0
        %v350 = vadd.f32 0.0, %v349
        %v351 = vpop.f32.mrf.mxu0
        %v352 = vadd.f32 0.0, %v351
        %353 = vmatmul.bf16.gmra.mxu0 %v288
        %v354 = vpop.f32.mrf.mxu0
        %v355 = vadd.f32 0.0, %v354
        %v356 = vpop.f32.mrf.mxu0
        %v357 = vadd.f32 0.0, %v356
        %358 = vmatmul.bf16.gmra.mxu0 %v291
        %v359 = vpop.f32.mrf.mxu0
        %v360 = vadd.f32 0.0, %v359
        %v361 = vpop.f32.mrf.mxu0
        %v362 = vadd.f32 0.0, %v361
        %363 = vmatmul.bf16.gmra.mxu0 %v294
        %v364 = vpop.f32.mrf.mxu0
        %v365 = vadd.f32 0.0, %v364
        %v366 = vpop.f32.mrf.mxu0
        %v367 = vadd.f32 0.0, %v366
        %368 = vmatmul.bf16.gmra.mxu0 %v297
        %v369 = vpop.f32.mrf.mxu0
        %v370 = vadd.f32 0.0, %v369
        %v371 = vpop.f32.mrf.mxu0
        %v372 = vadd.f32 0.0, %v371
        %373 = vmatmul.bf16.gmra.mxu0 %v300
        %v374 = vpop.f32.mrf.mxu0
        %v375 = vadd.f32 0.0, %v374
        %v376 = vpop.f32.mrf.mxu0
        %v377 = vadd.f32 0.0, %v376
        %378 = vmatmul.bf16.gmra.mxu0 %v303
        %v379 = vpop.f32.mrf.mxu0
        %v380 = vadd.f32 0.0, %v379
        %v381 = vpop.f32.mrf.mxu0
        %v382 = vadd.f32 0.0, %v381
        %383 = vmatmul.bf16.gmra.mxu0 %v306
        %v384 = vpop.f32.mrf.mxu0
        %v385 = vadd.f32 0.0, %v384
        %v386 = vpop.f32.mrf.mxu0
        %v387 = vadd.f32 0.0, %v386
        %388 = vmatmul.bf16.gmra.mxu0 %v309
        %v389 = vpop.f32.mrf.mxu0
        %v390 = vadd.f32 0.0, %v389
        %v391 = vpop.f32.mrf.mxu0
        %v392 = vadd.f32 0.0, %v391
        %393 = vmatmul.bf16.gmra.mxu0 %v312
        %v394 = vpop.f32.mrf.mxu0
        %v395 = vadd.f32 0.0, %v394
        %v396 = vpop.f32.mrf.mxu0
        %v397 = vadd.f32 0.0, %v396
        %398 = vmatmul.bf16.gmra.mxu0 %v315
        %v399 = vpop.f32.mrf.mxu0
        %v400 = vadd.f32 0.0, %v399
        %v401 = vpop.f32.mrf.mxu0
        %v402 = vadd.f32 0.0, %v401
        %403 = vmatmul.bf16.gmra.mxu0 %v318
        %v404 = vpop.f32.mrf.mxu0
        %v405 = vadd.f32 0.0, %v404
        %v406 = vpop.f32.mrf.mxu0
        %v407 = vadd.f32 0.0, %v406
        %408 = vmatmul.bf16.gmra.mxu0 %v321
        %v409 = vpop.f32.mrf.mxu0
        %v410 = vadd.f32 0.0, %v409
        %v411 = vpop.f32.mrf.mxu0
        %v412 = vadd.f32 0.0, %v411
        %413 = vmatmul.bf16.gmra.mxu0 %v324
        %v414 = vpop.f32.mrf.mxu0
        %v415 = vadd.f32 0.0, %v414
        %v416 = vpop.f32.mrf.mxu0
        %v417 = vadd.f32 0.0, %v416
        %418 = vdwg.mxu0
        %v419 = vadd.f32 %v340, %v342
        %v420 = vadd.f32 %v419, %v345
        %v421 = vadd.f32 %v420, %v347
        %v422 = vadd.f32 %v421, %v350
        %v423 = vadd.f32 %v422, %v352
        %v424 = vadd.f32 %v423, %v355
        %v425 = vadd.f32 %v424, %v357
        %v426 = vadd.f32 %v425, %v360
        %v427 = vadd.f32 %v426, %v362
        %v428 = vadd.f32 %v427, %v365
        %v429 = vadd.f32 %v428, %v367
        %v430 = vadd.f32 %v429, %v370
        %v431 = vadd.f32 %v430, %v372
        %v432 = vadd.f32 %v431, %v375
        %v433 = vadd.f32 %v432, %v377
        %v434 = vadd.f32 %v433, %v380
        %v435 = vadd.f32 %v434, %v382
        %v436 = vadd.f32 %v435, %v385
        %v437 = vadd.f32 %v436, %v387
        %v438 = vadd.f32 %v437, %v390
        %v439 = vadd.f32 %v438, %v392
        %v440 = vadd.f32 %v439, %v395
        %v441 = vadd.f32 %v440, %v397
        %v442 = vadd.f32 %v441, %v400
        %v443 = vadd.f32 %v442, %v402
        %v444 = vadd.f32 %v443, %v405
        %v445 = vadd.f32 %v444, %v407
        %v446 = vadd.f32 %v445, %v410
        %v447 = vadd.f32 %v446, %v412
        %v448 = vadd.f32 %v447, %v415
        %v449 = vadd.f32 %v448, %v417
        %v450 = vrot.slane %v449, 4
        %v451 = vadd.f32 %v449, %v450
        %v452 = vrot.slane %v451, 2
        %v453 = vadd.f32 %v451, %v452
        %v454 = vrot.slane %v453, 1
        %v455 = vadd.f32 %v453, %v454
        %v456 = vmul.f32 %v340, %v340
        %v457 = vmul.f32 %v342, %v342
        %v458 = vmul.f32 %v345, %v345
        %v459 = vmul.f32 %v347, %v347
        %v460 = vmul.f32 %v350, %v350
        %v461 = vmul.f32 %v352, %v352
        %v462 = vmul.f32 %v355, %v355
        %v463 = vmul.f32 %v357, %v357
        %v464 = vmul.f32 %v360, %v360
        %v465 = vmul.f32 %v362, %v362
        %v466 = vmul.f32 %v365, %v365
        %v467 = vmul.f32 %v367, %v367
        %v468 = vmul.f32 %v370, %v370
        %v469 = vmul.f32 %v372, %v372
        %v470 = vmul.f32 %v375, %v375
        %v471 = vmul.f32 %v377, %v377
        %v472 = vmul.f32 %v380, %v380
        %v473 = vmul.f32 %v382, %v382
        %v474 = vmul.f32 %v385, %v385
        %v475 = vmul.f32 %v387, %v387
        %v476 = vmul.f32 %v390, %v390
        %v477 = vmul.f32 %v392, %v392
        %v478 = vmul.f32 %v395, %v395
        %v479 = vmul.f32 %v397, %v397
        %v480 = vmul.f32 %v400, %v400
        %v481 = vmul.f32 %v402, %v402
        %v482 = vmul.f32 %v405, %v405
        %v483 = vmul.f32 %v407, %v407
        %v484 = vmul.f32 %v410, %v410
        %v485 = vmul.f32 %v412, %v412
        %v486 = vmul.f32 %v415, %v415
        %v487 = vmul.f32 %v417, %v417
        %v488 = vadd.f32 %v456, %v457
        %v489 = vadd.f32 %v488, %v458
        %v490 = vadd.f32 %v489, %v459
        %v491 = vadd.f32 %v490, %v460
        %v492 = vadd.f32 %v491, %v461
        %v493 = vadd.f32 %v492, %v462
        %v494 = vadd.f32 %v493, %v463
        %v495 = vadd.f32 %v494, %v464
        %v496 = vadd.f32 %v495, %v465
        %v497 = vadd.f32 %v496, %v466
        %v498 = vadd.f32 %v497, %v467
        %v499 = vadd.f32 %v498, %v468
        %v500 = vadd.f32 %v499, %v469
        %v501 = vadd.f32 %v500, %v470
        %v502 = vadd.f32 %v501, %v471
        %v503 = vadd.f32 %v502, %v472
        %v504 = vadd.f32 %v503, %v473
        %v505 = vadd.f32 %v504, %v474
        %v506 = vadd.f32 %v505, %v475
        %v507 = vadd.f32 %v506, %v476
        %v508 = vadd.f32 %v507, %v477
        %v509 = vadd.f32 %v508, %v478
        %v510 = vadd.f32 %v509, %v479
        %v511 = vadd.f32 %v510, %v480
        %v512 = vadd.f32 %v511, %v481
        %v513 = vadd.f32 %v512, %v482
        %v514 = vadd.f32 %v513, %v483
        %v515 = vadd.f32 %v514, %v484
        %v516 = vadd.f32 %v515, %v485
        %v517 = vadd.f32 %v516, %v486
        %v518 = vadd.f32 %v517, %v487
        %v519 = vrot.slane %v518, 4
        %v520 = vadd.f32 %v518, %v519
        %v521 = vrot.slane %v520, 2
        %v522 = vadd.f32 %v520, %v521
        %v523 = vrot.slane %v522, 1
        %v524 = vadd.f32 %v522, %v523
        %vm525 = vcmask 1040384
        %v526 = vsel %vm525, %v455, %v524
        %v527 = vsel %vm326, %v526, 0.0
        %528 = vst [vmem:[%s137] sm:$0xff] %v527
        %s529 = sand.u32 %s71, 1
        %s530 = scalar_lea.sflag [#allocation3], %s529
        %s531 = sand.u32 %s71, 1
        %s532 = smul.addr %s531, 8
        %s533 = scalar_lea.vmem [#allocation2], %s532
        // Predicated region
        $region29: #{tpu_custom_call.1} parent=27 // pred_check
          %p534 = pneg %p81
        $region30: #{tpu_custom_call.1} parent=27 // pred_check_branch
          %536 = sbr.rel (%p534) target = $region32
        $region31: #{tpu_custom_call.1} parent=27 // pred_region
          %538 = vsyncadd %s530, 0
          %s539 = smul.addr %s16, 8
          %s540 = scalar_lea.hbm %s2, %s539
          %s542 = sshll.u32 %s533, 4
          %s543 = int_to_ptr.vmem [resolvable:$true] %s542
          %s544 = sshll.u32 %s540, 4
          %s545 = int_to_ptr.hbm [resolvable:$true] %s544
          %547 = dma.vmem_to_hbm [thread:$0]  %s543, 128, %s545, %s530
        $region32: #{tpu_custom_call.1} parent=27 // pred_fallthru
          _
      $region28: #{tpu_custom_call.1} parent=5 // pred_fallthru
        _
      %p548 = scmp.le.s32.totalorder 2, %s11
      // Predicated region
      $region33: #{tpu_custom_call.1} parent=5 // pred_check
        %p549 = pneg %p548
      $region34: #{tpu_custom_call.1} parent=5 // pred_check_branch
        %551 = sbr.rel (%p549) target = $region36
      $region35: #{tpu_custom_call.1} parent=5 // pred_region
        %s552 = ssub.s32 %s11, 2
        // Predicated region
        $region37: #{tpu_custom_call.1} parent=35 // pred_check
          %p553 = pneg %p87
        $region38: #{tpu_custom_call.1} parent=35 // pred_check_branch
          %555 = sbr.rel (%p553) target = $region40
        $region39: #{tpu_custom_call.1} parent=35 // pred_region
          %s556 = sand.u32 %s72, 1
          %s557 = scalar_lea.sflag [#allocation3], %s556
          %s558 = sand.u32 %s72, 1
          %s559 = smul.addr %s558, 8
          %s560 = scalar_lea.vmem [#allocation2], %s559
          %562 = dma.done %s557, 128
        $region40: #{tpu_custom_call.1} parent=35 // pred_fallthru
          _
      $region36: #{tpu_custom_call.1} parent=5 // pred_fallthru
        _
    $region6: #{tpu_custom_call.1} parent=1 // loop_footer
      %s15 = sadd.s32 1, %s11
    $region7: #{tpu_custom_call.1} parent=1 // loop_footer_branch
      %10 = sbr.rel target = $region3
    $region8: #{tpu_custom_call.1} parent=1 // loop_exit
      _
    %563 = vsyncpa [#allocation3], 1
    %s564 = scalar_lea.sflag [#allocation3], 1
    %565 = vsyncpa %s564, 1

</llo_original>
